<compile_context>
chip_gen: v6e
topology: v6e:2x2x1
jax: 0.10.0
libtpu: 0.0.40
codegen_flags: <defaults>
</compile_context>

<pallas_src>
import jax
import jax.numpy as jnp
from jax.experimental import pallas as pl
from jax.experimental.pallas import tpu as pltpu


def highway_kernel(x_ref, w_ref, b_ref, o_ref):
    # x_ref: (bm, Dp) activation tile (feature dim padded to lane width)
    # w_ref: (L, Dp, 2*Dp) fused [nonlinear | gate] projection weights
    # b_ref: (L, 1, 2*Dp)  fused biases
    # o_ref: (bm, Dp)
    dp = x_ref.shape[-1]
    num_layers = w_ref.shape[0]
    cur = x_ref[...].astype(jnp.float32)
    for l in range(num_layers):  # static unroll; layers are sequentially dependent
        # One fused MXU matmul per layer -> (bm, 2*Dp), lane-dense output.
        proj = jnp.dot(cur, w_ref[l], preferred_element_type=jnp.float32) + b_ref[l]
        h = jnp.maximum(proj[:, :dp], 0.0)      # relu(nonlinear part), VPU
        gate = jax.nn.sigmoid(proj[:, dp:])     # sigmoid rides the EUP slot
        # g*cur + (1-g)*h  ==  h + g*(cur - h)  (one fewer multiply, no (1-g) temp)
        cur = h + gate * (cur - h)
    o_ref[...] = cur.astype(o_ref.dtype)


def _round_up(x, m):
    return (x + m - 1) // m * m


def _make_highway_call(Bp, Dp, L, bm, out_dtype, single_buffer_weights):
    def inv_spec(shape):
        index_map = lambda i: (0,) * len(shape)
        if single_buffer_weights:
            # Grid-invariant operand: no need for double buffering.
            return pl.BlockSpec(shape, index_map, pipeline_mode=pl.Buffered(1))
        return pl.BlockSpec(shape, index_map)

    # Explicit VMEM budget (v7x has only 64 MiB / TC; scoped default is 32 MiB).
    weight_bytes = (2 if not single_buffer_weights else 1) * (
        L * Dp * 2 * Dp * 4 + L * 2 * Dp * 4
    )
    io_bytes = 2 * 2 * bm * Dp * 4  # x + out tiles, double-buffered
    vmem_limit = int(min(max(weight_bytes + io_bytes + (4 << 20), 32 << 20), 64 << 20))

    return pl.pallas_call(
        highway_kernel,
        out_shape=jax.ShapeDtypeStruct((Bp, Dp), out_dtype),
        grid_spec=pltpu.PrefetchScalarGridSpec(
            num_scalar_prefetch=0,
            grid=(Bp // bm,),
            in_specs=[
                pl.BlockSpec((bm, Dp), lambda i: (i, 0)),   # x batch tile
                inv_spec((L, Dp, 2 * Dp)),                  # fused weights (invariant)
                inv_spec((L, 1, 2 * Dp)),                   # fused biases  (invariant)
            ],
            out_specs=pl.BlockSpec((bm, Dp), lambda i: (i, 0)),
        ),
        compiler_params=pltpu.CompilerParams(
            dimension_semantics=("parallel",),
            vmem_limit_bytes=vmem_limit,
        ),
    )


def highway(x, weights, biases, *, bm_max=256):
    """Highway stack.

    x:       (B, D)
    weights: (L, 2D, D)  torch.nn.Linear layout (proj = x @ W.T + b)
    biases:  (L, 2D)
    """
    B, D = x.shape
    L = weights.shape[0]
    assert weights.shape == (L, 2 * D, D) and biases.shape == (L, 2 * D)

    # Lane-dense feature padding. Zero-padded weight rows/cols + zero bias keep the
    # padded activation columns exactly 0 through every layer:
    #   h_pad = relu(0) = 0, gate_pad = sigmoid(0) = 0.5, new_pad = 0 + 0.5*(0-0) = 0.
    Dp = max(128, _round_up(D, 128))

    # Batch tiling: one grid step for small batches, else 256-row tiles.
    if B <= bm_max:
        bm, Bp = B, B
    else:
        bm = bm_max
        Bp = _round_up(B, bm)

    x_p = jnp.zeros((Bp, Dp), jnp.float32).at[:B, :D].set(x.astype(jnp.float32))

    # Fuse [W_h | W_g] into one (Dp, 2*Dp) rhs per layer (single MXU matmul / layer).
    w_h = jnp.transpose(weights[:, :D, :], (0, 2, 1)).astype(jnp.float32)  # (L, D, D)
    w_g = jnp.transpose(weights[:, D:, :], (0, 2, 1)).astype(jnp.float32)  # (L, D, D)
    w_f = jnp.zeros((L, Dp, 2 * Dp), jnp.float32)
    w_f = w_f.at[:, :D, :D].set(w_h)
    w_f = w_f.at[:, :D, Dp:Dp + D].set(w_g)
    b_f = jnp.zeros((L, 1, 2 * Dp), jnp.float32)
    b_f = b_f.at[:, 0, :D].set(biases[:, :D].astype(jnp.float32))
    b_f = b_f.at[:, 0, Dp:Dp + D].set(biases[:, D:].astype(jnp.float32))

    try:
        fn = _make_highway_call(Bp, Dp, L, bm, x.dtype, single_buffer_weights=True)
        out_p = jax.block_until_ready(fn(x_p, w_f, b_f))
    except Exception:  # pipeline_mode=Buffered(1) unsupported -> default buffering
        fn = _make_highway_call(Bp, Dp, L, bm, x.dtype, single_buffer_weights=False)
        out_p = fn(x_p, w_f, b_f)

    return out_p[:B, :D].astype(x.dtype)


def highway_ref(x, weights, biases):
    # Pure-JAX reference mirroring the PyTorch forward.
    D = x.shape[-1]
    cur = x.astype(jnp.float32)
    for l in range(weights.shape[0]):
        proj = cur @ weights[l].T + biases[l]
        h = jax.nn.relu(proj[:, :D])
        gate = jax.nn.sigmoid(proj[:, D:])
        cur = gate * cur + (1.0 - gate) * h
    return cur.astype(x.dtype)


def init_params(key, input_dim, num_layers):
    # Mimics torch.nn.Linear(input_dim, 2*input_dim) init:
    #   weight (2D, D), bias (2D,) ~ U(-1/sqrt(D), 1/sqrt(D)); then bias[D:] = 1.
    D = input_dim
    bound = 1.0 / jnp.sqrt(jnp.float32(D))
    ws, bs = [], []
    for _ in range(num_layers):
        key, kw, kb = jax.random.split(key, 3)
        W = jax.random.uniform(kw, (2 * D, D), jnp.float32, -bound, bound)
        b = jax.random.uniform(kb, (2 * D,), jnp.float32, -bound, bound)
        b = b.at[D:].set(1.0)  # gate bias filled with 1, as in the module __init__
        ws.append(W)
        bs.append(b)
    return jnp.stack(ws), jnp.stack(bs)


if __name__ == "__main__":
    key = jax.random.PRNGKey(0)
    B, D, L = 64, 32, 2   # batch, input_dim, num_layers

    key, kx = jax.random.split(key)
    x = jax.random.normal(kx, (B, D), jnp.float32)
    weights, biases = init_params(key, D, L)

    out = jax.block_until_ready(highway(x, weights, biases))

    ref = highway_ref(x, weights, biases)
    assert out.shape == (B, D)
    assert jnp.allclose(out, ref, atol=1e-5, rtol=1e-5), "mismatch vs reference"

    print("KERNEL_OK")
</pallas_src>

<mosaic_0001>
module attributes {stable_mosaic.version = 11 : i64} {
  func.func @highway_kernel(%arg0: i32, %arg1: memref<64x128xf32, #tpu.memory_space<vmem>>, %arg2: memref<2x128x256xf32, #tpu.memory_space<vmem>>, %arg3: memref<2x1x256xf32, #tpu.memory_space<vmem>>, %arg4: memref<64x128xf32, #tpu.memory_space<vmem>>) attributes {dimension_semantics = [#tpu.dimension_semantics<parallel>], iteration_bounds = array<i64: 1>, scalar_prefetch = 0 : i64, scratch_operands = 0 : i64, tpu.core_type = #tpu.core_type<tc>, window_params = [{transform_indices = @transform_0, window_bounds = array<i64: 64, 128>}, {pipeline_mode = #tpu.pipeline_mode<synchronous>, transform_indices = @transform_1, window_bounds = array<i64: 2, 128, 256>}, {pipeline_mode = #tpu.pipeline_mode<synchronous>, transform_indices = @transform_2, window_bounds = array<i64: 2, 1, 256>}, {transform_indices = @transform_3, window_bounds = array<i64: 64, 128>}]} {
    %c0 = arith.constant 0 : index
    %c0_0 = arith.constant 0 : index
    %0 = vector.load %arg1[%c0, %c0_0] : memref<64x128xf32, #tpu.memory_space<vmem>>, vector<64x128xf32>
    %c0_1 = arith.constant 0 : index
    %c0_2 = arith.constant 0 : index
    %c0_3 = arith.constant 0 : index
    %1 = vector.load %arg2[%c0_1, %c0_2, %c0_3] : memref<2x128x256xf32, #tpu.memory_space<vmem>>, vector<1x128x256xf32>
    %2 = vector.shape_cast %1 : vector<1x128x256xf32> to vector<128x256xf32>
    %cst = arith.constant dense<0.000000e+00> : vector<64x256xf32>
    %3 = tpu.matmul %0, %2, %cst {dimension_numbers = #tpu.dot_dimension_numbers<[1], [0], [0], [1], [0, 0, 1, 1], [], []>} : vector<64x128xf32>, vector<128x256xf32>, vector<64x256xf32> -> vector<64x256xf32>
    %c0_4 = arith.constant 0 : index
    %c0_5 = arith.constant 0 : index
    %c0_6 = arith.constant 0 : index
    %4 = vector.load %arg3[%c0_4, %c0_5, %c0_6] : memref<2x1x256xf32, #tpu.memory_space<vmem>>, vector<1x1x256xf32>
    %5 = vector.shape_cast %4 : vector<1x1x256xf32> to vector<1x256xf32>
    %6 = vector.broadcast %5 : vector<1x256xf32> to vector<64x256xf32>
    %7 = arith.addf %3, %6 : vector<64x256xf32>
    %8 = vector.extract_strided_slice %7 {offsets = [0, 0], sizes = [64, 128], strides = [1, 1]} : vector<64x256xf32> to vector<64x128xf32>
    %cst_7 = arith.constant 0.000000e+00 : f32
    %9 = vector.broadcast %cst_7 : f32 to vector<64x128xf32>
    %10 = arith.maximumf %8, %9 : vector<64x128xf32>
    %11 = vector.extract_strided_slice %7 {offsets = [0, 128], sizes = [64, 128], strides = [1, 1]} : vector<64x256xf32> to vector<64x128xf32>
    %12 = arith.negf %11 : vector<64x128xf32>
    %13 = math.exp %12 : vector<64x128xf32>
    %cst_8 = arith.constant 1.000000e+00 : f32
    %14 = vector.broadcast %cst_8 : f32 to vector<64x128xf32>
    %15 = arith.addf %14, %13 : vector<64x128xf32>
    %16 = arith.divf %14, %15 : vector<64x128xf32>
    %17 = arith.subf %0, %10 : vector<64x128xf32>
    %18 = arith.mulf %16, %17 : vector<64x128xf32>
    %19 = arith.addf %10, %18 : vector<64x128xf32>
    %c1 = arith.constant 1 : index
    %c0_9 = arith.constant 0 : index
    %c0_10 = arith.constant 0 : index
    %20 = vector.load %arg2[%c1, %c0_9, %c0_10] : memref<2x128x256xf32, #tpu.memory_space<vmem>>, vector<1x128x256xf32>
    %21 = vector.shape_cast %20 : vector<1x128x256xf32> to vector<128x256xf32>
    %cst_11 = arith.constant dense<0.000000e+00> : vector<64x256xf32>
    %22 = tpu.matmul %19, %21, %cst_11 {dimension_numbers = #tpu.dot_dimension_numbers<[1], [0], [0], [1], [0, 0, 1, 1], [], []>} : vector<64x128xf32>, vector<128x256xf32>, vector<64x256xf32> -> vector<64x256xf32>
    %c1_12 = arith.constant 1 : index
    %c0_13 = arith.constant 0 : index
    %c0_14 = arith.constant 0 : index
    %23 = vector.load %arg3[%c1_12, %c0_13, %c0_14] : memref<2x1x256xf32, #tpu.memory_space<vmem>>, vector<1x1x256xf32>
    %24 = vector.shape_cast %23 : vector<1x1x256xf32> to vector<1x256xf32>
    %25 = vector.broadcast %24 : vector<1x256xf32> to vector<64x256xf32>
    %26 = arith.addf %22, %25 : vector<64x256xf32>
    %27 = vector.extract_strided_slice %26 {offsets = [0, 0], sizes = [64, 128], strides = [1, 1]} : vector<64x256xf32> to vector<64x128xf32>
    %cst_15 = arith.constant 0.000000e+00 : f32
    %28 = vector.broadcast %cst_15 : f32 to vector<64x128xf32>
    %29 = arith.maximumf %27, %28 : vector<64x128xf32>
    %30 = vector.extract_strided_slice %26 {offsets = [0, 128], sizes = [64, 128], strides = [1, 1]} : vector<64x256xf32> to vector<64x128xf32>
    %31 = arith.negf %30 : vector<64x128xf32>
    %32 = math.exp %31 : vector<64x128xf32>
    %cst_16 = arith.constant 1.000000e+00 : f32
    %33 = vector.broadcast %cst_16 : f32 to vector<64x128xf32>
    %34 = arith.addf %33, %32 : vector<64x128xf32>
    %35 = arith.divf %33, %34 : vector<64x128xf32>
    %36 = arith.subf %19, %29 : vector<64x128xf32>
    %37 = arith.mulf %35, %36 : vector<64x128xf32>
    %38 = arith.addf %29, %37 : vector<64x128xf32>
    %c0_17 = arith.constant 0 : index
    %c0_18 = arith.constant 0 : index
    %39 = vector.load %arg4[%c0_17, %c0_18] : memref<64x128xf32, #tpu.memory_space<vmem>>, vector<64x128xf32>
    tpu.vector_store %arg4[%c0_17, %c0_18], %38 {strides = array<i32>} : memref<64x128xf32, #tpu.memory_space<vmem>>, vector<64x128xf32>,
    return
  }
  func.func @transform_0(%arg0: i32) -> (i32, i32) {
    %c0_i32 = arith.constant 0 : i32
    %c0_i32_0 = arith.constant 0 : i32
    return %arg0, %c0_i32 : i32, i32
  }
  func.func @transform_1(%arg0: i32) -> (i32, i32, i32) {
    %c0_i32 = arith.constant 0 : i32
    %c0_i32_0 = arith.constant 0 : i32
    %c0_i32_1 = arith.constant 0 : i32
    %c0_i32_2 = arith.constant 0 : i32
    return %c0_i32, %c0_i32_0, %c0_i32_1 : i32, i32, i32
  }
  func.func @transform_2(%arg0: i32) -> (i32, i32, i32) {
    %c0_i32 = arith.constant 0 : i32
    %c0_i32_0 = arith.constant 0 : i32
    %c0_i32_1 = arith.constant 0 : i32
    %c0_i32_2 = arith.constant 0 : i32
    return %c0_i32, %c0_i32_0, %c0_i32_1 : i32, i32, i32
  }
  func.func @transform_3(%arg0: i32) -> (i32, i32) {
    %c0_i32 = arith.constant 0 : i32
    %c0_i32_0 = arith.constant 0 : i32
    return %arg0, %c0_i32 : i32, i32
  }
}

module attributes {stable_mosaic.version = 11 : i64} {
  func.func @highway_kernel(%arg0: i32, %arg1: memref<64x128xf32, #tpu.memory_space<vmem>>, %arg2: memref<2x128x256xf32, #tpu.memory_space<vmem>>, %arg3: memref<2x1x256xf32, #tpu.memory_space<vmem>>, %arg4: memref<64x128xf32, #tpu.memory_space<vmem>>) attributes {dimension_semantics = [#tpu.dimension_semantics<parallel>], iteration_bounds = array<i64: 1>, scalar_prefetch = 0 : i64, scratch_operands = 0 : i64, tpu.core_type = #tpu.core_type<tc>, window_params = [{transform_indices = @transform_0, window_bounds = array<i64: 64, 128>}, {pipeline_mode = #tpu.pipeline_mode<synchronous>, transform_indices = @transform_1, window_bounds = array<i64: 2, 128, 256>}, {pipeline_mode = #tpu.pipeline_mode<synchronous>, transform_indices = @transform_2, window_bounds = array<i64: 2, 1, 256>}, {transform_indices = @transform_3, window_bounds = array<i64: 64, 128>}]} {
    %c0 = arith.constant 0 : index
    %c0_0 = arith.constant 0 : index
    %0 = vector.load %arg1[%c0, %c0_0] : memref<64x128xf32, #tpu.memory_space<vmem>>, vector<64x128xf32>
    %c0_1 = arith.constant 0 : index
    %c0_2 = arith.constant 0 : index
    %c0_3 = arith.constant 0 : index
    %1 = vector.load %arg2[%c0_1, %c0_2, %c0_3] : memref<2x128x256xf32, #tpu.memory_space<vmem>>, vector<1x128x256xf32>
    %2 = vector.shape_cast %1 : vector<1x128x256xf32> to vector<128x256xf32>
    %cst = arith.constant dense<0.000000e+00> : vector<64x256xf32>
    %3 = tpu.matmul %0, %2, %cst {dimension_numbers = #tpu.dot_dimension_numbers<[1], [0], [0], [1], [0, 0, 1, 1], [], []>} : vector<64x128xf32>, vector<128x256xf32>, vector<64x256xf32> -> vector<64x256xf32>
    %c0_4 = arith.constant 0 : index
    %c0_5 = arith.constant 0 : index
    %c0_6 = arith.constant 0 : index
    %4 = vector.load %arg3[%c0_4, %c0_5, %c0_6] : memref<2x1x256xf32, #tpu.memory_space<vmem>>, vector<1x1x256xf32>
    %5 = vector.shape_cast %4 : vector<1x1x256xf32> to vector<1x256xf32>
    %6 = vector.broadcast %5 : vector<1x256xf32> to vector<64x256xf32>
    %7 = arith.addf %3, %6 : vector<64x256xf32>
    %8 = vector.extract_strided_slice %7 {offsets = [0, 0], sizes = [64, 128], strides = [1, 1]} : vector<64x256xf32> to vector<64x128xf32>
    %cst_7 = arith.constant 0.000000e+00 : f32
    %9 = vector.broadcast %cst_7 : f32 to vector<64x128xf32>
    %10 = arith.maximumf %8, %9 : vector<64x128xf32>
    %11 = vector.extract_strided_slice %7 {offsets = [0, 128], sizes = [64, 128], strides = [1, 1]} : vector<64x256xf32> to vector<64x128xf32>
    %12 = arith.negf %11 : vector<64x128xf32>
    %13 = math.exp %12 : vector<64x128xf32>
    %cst_8 = arith.constant 1.000000e+00 : f32
    %14 = vector.broadcast %cst_8 : f32 to vector<64x128xf32>
    %15 = arith.addf %14, %13 : vector<64x128xf32>
    %16 = arith.divf %14, %15 : vector<64x128xf32>
    %17 = arith.subf %0, %10 : vector<64x128xf32>
    %18 = arith.mulf %16, %17 : vector<64x128xf32>
    %19 = arith.addf %10, %18 : vector<64x128xf32>
    %c1 = arith.constant 1 : index
    %c0_9 = arith.constant 0 : index
    %c0_10 = arith.constant 0 : index
    %20 = vector.load %arg2[%c1, %c0_9, %c0_10] : memref<2x128x256xf32, #tpu.memory_space<vmem>>, vector<1x128x256xf32>
    %21 = vector.shape_cast %20 : vector<1x128x256xf32> to vector<128x256xf32>
    %cst_11 = arith.constant dense<0.000000e+00> : vector<64x256xf32>
    %22 = tpu.matmul %19, %21, %cst_11 {dimension_numbers = #tpu.dot_dimension_numbers<[1], [0], [0], [1], [0, 0, 1, 1], [], []>} : vector<64x128xf32>, vector<128x256xf32>, vector<64x256xf32> -> vector<64x256xf32>
    %c1_12 = arith.constant 1 : index
    %c0_13 = arith.constant 0 : index
    %c0_14 = arith.constant 0 : index
    %23 = vector.load %arg3[%c1_12, %c0_13, %c0_14] : memref<2x1x256xf32, #tpu.memory_space<vmem>>, vector<1x1x256xf32>
    %24 = vector.shape_cast %23 : vector<1x1x256xf32> to vector<1x256xf32>
    %25 = vector.broadcast %24 : vector<1x256xf32> to vector<64x256xf32>
    %26 = arith.addf %22, %25 : vector<64x256xf32>
    %27 = vector.extract_strided_slice %26 {offsets = [0, 0], sizes = [64, 128], strides = [1, 1]} : vector<64x256xf32> to vector<64x128xf32>
    %cst_15 = arith.constant 0.000000e+00 : f32
    %28 = vector.broadcast %cst_15 : f32 to vector<64x128xf32>
    %29 = arith.maximumf %27, %28 : vector<64x128xf32>
    %30 = vector.extract_strided_slice %26 {offsets = [0, 128], sizes = [64, 128], strides = [1, 1]} : vector<64x256xf32> to vector<64x128xf32>
    %31 = arith.negf %30 : vector<64x128xf32>
    %32 = math.exp %31 : vector<64x128xf32>
    %cst_16 = arith.constant 1.000000e+00 : f32
    %33 = vector.broadcast %cst_16 : f32 to vector<64x128xf32>
    %34 = arith.addf %33, %32 : vector<64x128xf32>
    %35 = arith.divf %33, %34 : vector<64x128xf32>
    %36 = arith.subf %19, %29 : vector<64x128xf32>
    %37 = arith.mulf %35, %36 : vector<64x128xf32>
    %38 = arith.addf %29, %37 : vector<64x128xf32>
    %c0_17 = arith.constant 0 : index
    %c0_18 = arith.constant 0 : index
    %39 = vector.load %arg4[%c0_17, %c0_18] : memref<64x128xf32, #tpu.memory_space<vmem>>, vector<64x128xf32>
    tpu.vector_store %arg4[%c0_17, %c0_18], %38 {strides = array<i32>} : memref<64x128xf32, #tpu.memory_space<vmem>>, vector<64x128xf32>,
    return
  }
  func.func @transform_0(%arg0: i32) -> (i32, i32) {
    %c0_i32 = arith.constant 0 : i32
    %c0_i32_0 = arith.constant 0 : i32
    return %arg0, %c0_i32 : i32, i32
  }
  func.func @transform_1(%arg0: i32) -> (i32, i32, i32) {
    %c0_i32 = arith.constant 0 : i32
    %c0_i32_0 = arith.constant 0 : i32
    %c0_i32_1 = arith.constant 0 : i32
    %c0_i32_2 = arith.constant 0 : i32
    return %c0_i32, %c0_i32_0, %c0_i32_1 : i32, i32, i32
  }
  func.func @transform_2(%arg0: i32) -> (i32, i32, i32) {
    %c0_i32 = arith.constant 0 : i32
    %c0_i32_0 = arith.constant 0 : i32
    %c0_i32_1 = arith.constant 0 : i32
    %c0_i32_2 = arith.constant 0 : i32
    return %c0_i32, %c0_i32_0, %c0_i32_1 : i32, i32, i32
  }
  func.func @transform_3(%arg0: i32) -> (i32, i32) {
    %c0_i32 = arith.constant 0 : i32
    %c0_i32_0 = arith.constant 0 : i32
    return %arg0, %c0_i32 : i32, i32
  }
}

</mosaic_0001>

<llo_original>
// kernel: tpu_custom_call.1
$region0: #{tpu_custom_call.1}
  #allocation0 [shape = 'u32[]', space=smem, size = 0x4, offset = 0x4, fixed_abs, tag = 'smem constant byte address 0x4 - core index']
  #allocation1 [shape = 'u32[144,128]{1,0:T(1,128)}', space=vmem, size = 0x12000, scoped, tag = 'internal scratch']
  %s0 = inlined_call_operand.hbm [shape: f32[64,128], index: 0, kind: input, shape index: {}]
  %s1 = inlined_call_operand.hbm [shape: f32[2,128,256], index: 1, kind: input, shape index: {}]
  %s2 = inlined_call_operand.hbm [shape: f32[2,1,256], index: 2, kind: input, shape index: {}]
  %s3 = inlined_call_operand.hbm [shape: f32[64,128], index: 3, kind: output, shape index: {}]
  %s4 = sld [smem:[#allocation0]]
  $region34: #{tpu_custom_call.1} parent=0
    _
  %s6 = ssub.s32 1, %s4
  %s7 = scalar_select 0, %s6, %s4
  $region1: #{tpu_custom_call.1} parent=0
    #allocation2 [shape = 'u8[32768]{0}', space=vmem, size = 0x8000, scoped, tag = 'input window, operand 0, single buffered']
    #allocation3 [shape = 's32[1]{0}', space=sflag, size = 0x4, scoped, tag = 'scoped memory for tpu_custom_call.1']
    #allocation4 [shape = 's32[1]{0}', space=sflag, size = 0x4, scoped, tag = 'scoped memory for tpu_custom_call.1']
    #allocation5 [shape = 'u8[262144]{0}', space=vmem, size = 0x40000, scoped, tag = 'input window, operand 1, single buffered']
    #allocation6 [shape = 's32[1]{0}', space=sflag, size = 0x4, scoped, tag = 'scoped memory for tpu_custom_call.1']
    #allocation7 [shape = 'u8[2048]{0}', space=vmem, size = 0x800, scoped, tag = 'input window, operand 2, single buffered']
    #allocation8 [shape = 'u8[32768]{0}', space=vmem, size = 0x8000, scoped, tag = 'output window, operand 0, single buffered']
    %8 = vsyncpa [#allocation3], 0
    %9 = vsyncpa [#allocation6], 0
    %10 = vsyncpa [#allocation4], 0
    // Predicated region
    $region2: #{tpu_custom_call.1} parent=1 // pred_check
      _
    $region3: #{tpu_custom_call.1} parent=1 // pred_check_branch
      %12 = sbr.rel (0) target = $region5
    $region4: #{tpu_custom_call.1} parent=1 // pred_region
      %s14 = ssub.s32 1024, 1024
      %15 = vsyncadd [#allocation3], %s14
      %s16 = sshll.u32 [#allocation2], 4
      %s17 = int_to_ptr.vmem [resolvable:$true] %s16
      %22 = dma.hbm_to_vmem [thread:$0]  %s0, 1024, %s17, [#allocation3], 128, 128, 8
    $region5: #{tpu_custom_call.1} parent=1 // pred_fallthru
      _
    // Predicated region
    $region6: #{tpu_custom_call.1} parent=1 // pred_check
      _
    $region7: #{tpu_custom_call.1} parent=1 // pred_check_branch
      %24 = sbr.rel (0) target = $region9
    $region8: #{tpu_custom_call.1} parent=1 // pred_region
      %s26 = ssub.s32 8192, 8192
      %27 = vsyncadd [#allocation6], %s26
      %s28 = sshll.u32 [#allocation5], 4
      %s29 = int_to_ptr.vmem [resolvable:$true] %s28
      %34 = dma.hbm_to_vmem [thread:$0]  %s1, 8192, %s29, [#allocation6], 256, 256, 16
    $region9: #{tpu_custom_call.1} parent=1 // pred_fallthru
      _
    // Predicated region
    $region10: #{tpu_custom_call.1} parent=1 // pred_check
      _
    $region11: #{tpu_custom_call.1} parent=1 // pred_check_branch
      %36 = sbr.rel (0) target = $region13
    $region12: #{tpu_custom_call.1} parent=1 // pred_region
      %s38 = ssub.s32 64, 64
      %39 = vsyncadd [#allocation6], %s38
      %s40 = sshll.u32 [#allocation7], 4
      %s41 = int_to_ptr.vmem [resolvable:$true] %s40
      %46 = dma.hbm_to_vmem [thread:$0]  %s2, 64, %s41, [#allocation6], 32, 32, 2
    $region13: #{tpu_custom_call.1} parent=1 // pred_fallthru
      _
    // Predicated region
    $region14: #{tpu_custom_call.1} parent=1 // pred_check
      _
    $region15: #{tpu_custom_call.1} parent=1 // pred_check_branch
      %48 = sbr.rel (0) target = $region17
    $region16: #{tpu_custom_call.1} parent=1 // pred_region
      %49 = dma.done [#allocation3], 1024
    $region17: #{tpu_custom_call.1} parent=1 // pred_fallthru
      _
    // Predicated region
    $region18: #{tpu_custom_call.1} parent=1 // pred_check
      _
    $region19: #{tpu_custom_call.1} parent=1 // pred_check_branch
      %51 = sbr.rel (0) target = $region21
    $region20: #{tpu_custom_call.1} parent=1 // pred_region
      %52 = dma.done [#allocation6], 8192
    $region21: #{tpu_custom_call.1} parent=1 // pred_fallthru
      _
    // Predicated region
    $region22: #{tpu_custom_call.1} parent=1 // pred_check
      _
    $region23: #{tpu_custom_call.1} parent=1 // pred_check_branch
      %54 = sbr.rel (0) target = $region25
    $region24: #{tpu_custom_call.1} parent=1 // pred_region
      %55 = dma.done [#allocation6], 64
    $region25: #{tpu_custom_call.1} parent=1 // pred_fallthru
      _
    %v56 = vld [vmem:[#allocation2] sm:$0xff]
    %v57 = vld [vmem:[#allocation2 + $0x8] sm:$0xff]
    %v58 = vld [vmem:[#allocation2 + $0x10] sm:$0xff]
    %v59 = vld [vmem:[#allocation2 + $0x18] sm:$0xff]
    %v60 = vld [vmem:[#allocation2 + $0x20] sm:$0xff]
    %v61 = vld [vmem:[#allocation2 + $0x28] sm:$0xff]
    %v62 = vld [vmem:[#allocation2 + $0x30] sm:$0xff]
    %v63 = vld [vmem:[#allocation2 + $0x38] sm:$0xff]
    %v64 = vld [vmem:[#allocation5] sm:$0xff]
    %v65 = vld [vmem:[#allocation5 + $0x8] sm:$0xff]
    %v66 = vld [vmem:[#allocation5 + $0x10] sm:$0xff]
    %v67 = vld [vmem:[#allocation5 + $0x18] sm:$0xff]
    %v68 = vld [vmem:[#allocation5 + $0x20] sm:$0xff]
    %v69 = vld [vmem:[#allocation5 + $0x28] sm:$0xff]
    %v70 = vld [vmem:[#allocation5 + $0x30] sm:$0xff]
    %v71 = vld [vmem:[#allocation5 + $0x38] sm:$0xff]
    %v72 = vld [vmem:[#allocation5 + $0x40] sm:$0xff]
    %v73 = vld [vmem:[#allocation5 + $0x48] sm:$0xff]
    %v74 = vld [vmem:[#allocation5 + $0x50] sm:$0xff]
    %v75 = vld [vmem:[#allocation5 + $0x58] sm:$0xff]
    %v76 = vld [vmem:[#allocation5 + $0x60] sm:$0xff]
    %v77 = vld [vmem:[#allocation5 + $0x68] sm:$0xff]
    %v78 = vld [vmem:[#allocation5 + $0x70] sm:$0xff]
    %v79 = vld [vmem:[#allocation5 + $0x78] sm:$0xff]
    %v80 = vld [vmem:[#allocation5 + $0x80] sm:$0xff]
    %v81 = vld [vmem:[#allocation5 + $0x88] sm:$0xff]
    %v82 = vld [vmem:[#allocation5 + $0x90] sm:$0xff]
    %v83 = vld [vmem:[#allocation5 + $0x98] sm:$0xff]
    %v84 = vld [vmem:[#allocation5 + $0xa0] sm:$0xff]
    %v85 = vld [vmem:[#allocation5 + $0xa8] sm:$0xff]
    %v86 = vld [vmem:[#allocation5 + $0xb0] sm:$0xff]
    %v87 = vld [vmem:[#allocation5 + $0xb8] sm:$0xff]
    %v88 = vld [vmem:[#allocation5 + $0xc0] sm:$0xff]
    %v89 = vld [vmem:[#allocation5 + $0xc8] sm:$0xff]
    %v90 = vld [vmem:[#allocation5 + $0xd0] sm:$0xff]
    %v91 = vld [vmem:[#allocation5 + $0xd8] sm:$0xff]
    %v92 = vld [vmem:[#allocation5 + $0xe0] sm:$0xff]
    %v93 = vld [vmem:[#allocation5 + $0xe8] sm:$0xff]
    %v94 = vld [vmem:[#allocation5 + $0xf0] sm:$0xff]
    %v95 = vld [vmem:[#allocation5 + $0xf8] sm:$0xff]
    %v96 = vld [vmem:[#allocation7] sm:$0x3]
    %v98 = vlaneseq
    %v99 = vshrl.u32 %v98, 7
    %v100 = vsub.s32 0, %v99
    %v101 = vrot.slane %v96, %v100
    %v102 = vlaneseq
    %v103 = vshrl.u32 %v102, 7
    %v104 = vsub.s32 1, %v103
    %v105 = vrot.slane %v96, %v104
    %108 = vmatprep.subr.mxu0 %v95
    %109 = vmatpush1.msra.mxu0 %v94
    %110 = vmatprep.subr.mxu0 %v93
    %111 = vmatpush1.msra.mxu0 %v92
    %112 = vmatprep.subr.mxu0 %v91
    %113 = vmatpush1.msra.mxu0 %v90
    %114 = vmatprep.subr.mxu0 %v89
    %115 = vmatpush1.msra.mxu0 %v88
    %116 = vmatprep.subr.mxu0 %v87
    %117 = vmatpush1.msra.mxu0 %v86
    %118 = vmatprep.subr.mxu0 %v85
    %119 = vmatpush1.msra.mxu0 %v84
    %120 = vmatprep.subr.mxu0 %v83
    %121 = vmatpush1.msra.mxu0 %v82
    %122 = vmatprep.subr.mxu0 %v81
    %123 = vmatpush1.msra.mxu0 %v80
    %124 = vmatprep.subr.mxu0 %v79
    %125 = vmatpush1.msra.mxu0 %v78
    %126 = vmatprep.subr.mxu0 %v77
    %127 = vmatpush1.msra.mxu0 %v76
    %128 = vmatprep.subr.mxu0 %v75
    %129 = vmatpush1.msra.mxu0 %v74
    %130 = vmatprep.subr.mxu0 %v73
    %131 = vmatpush1.msra.mxu0 %v72
    %132 = vmatprep.subr.mxu0 %v71
    %133 = vmatpush1.msra.mxu0 %v70
    %134 = vmatprep.subr.mxu0 %v69
    %135 = vmatpush1.msra.mxu0 %v68
    %136 = vmatprep.subr.mxu0 %v67
    %137 = vmatpush1.msra.mxu0 %v66
    %138 = vmatprep.subr.mxu0 %v65
    %139 = vmatpush1.msra.mxu0 %v64
    %140 = vmatprep.subr.mxu0 0.0
    %141 = vmatpush2.msra.mxu0 0.0
    %142 = vmatprep.subr.mxu0 0.0
    %143 = vmatpush2.msra.mxu0 0.0
    %144 = vmatprep.subr.mxu0 0.0
    %145 = vmatpush2.msra.mxu0 0.0
    %146 = vmatprep.subr.mxu0 0.0
    %147 = vmatpush2.msra.mxu0 0.0
    %148 = vmatprep.subr.mxu0 0.0
    %149 = vmatpush2.msra.mxu0 0.0
    %150 = vmatprep.subr.mxu0 0.0
    %151 = vmatpush2.msra.mxu0 0.0
    %152 = vmatprep.subr.mxu0 0.0
    %153 = vmatpush2.msra.mxu0 0.0
    %154 = vmatprep.subr.mxu0 0.0
    %155 = vmatpush2.msra.mxu0 0.0
    %156 = vmatprep.subr.mxu0 0.0
    %157 = vmatpush2.msra.mxu0 0.0
    %158 = vmatprep.subr.mxu0 0.0
    %159 = vmatpush2.msra.mxu0 0.0
    %160 = vmatprep.subr.mxu0 0.0
    %161 = vmatpush2.msra.mxu0 0.0
    %162 = vmatprep.subr.mxu0 0.0
    %163 = vmatpush2.msra.mxu0 0.0
    %164 = vmatprep.subr.mxu0 0.0
    %165 = vmatpush2.msra.mxu0 0.0
    %166 = vmatprep.subr.mxu0 0.0
    %167 = vmatpush2.msra.mxu0 0.0
    %168 = vmatprep.subr.mxu0 0.0
    %169 = vmatpush2.msra.mxu0 0.0
    %170 = vmatprep.subr.mxu0 0.0
    %171 = vmatpush2.msra.mxu0 0.0
    %172 = vmatprep.mubr.f32.mxu0 0.0
    %173 = vmatmul.mubr.f32.gmra.mxu0 %v56
    %v174 = vpop.f32.mrf.mxu0
    %v175 = vadd.f32 %v101, %v174
    %v176 = vpop.f32.mrf.mxu0
    %v177 = vadd.f32 %v105, %v176
    %178 = vmatprep.mubr.f32.mxu0 0.0
    %179 = vmatmul.mubr.f32.gmra.mxu0 %v57
    %v180 = vpop.f32.mrf.mxu0
    %v181 = vadd.f32 %v101, %v180
    %v182 = vpop.f32.mrf.mxu0
    %v183 = vadd.f32 %v105, %v182
    %184 = vmatprep.mubr.f32.mxu0 0.0
    %185 = vmatmul.mubr.f32.gmra.mxu0 %v58
    %v186 = vpop.f32.mrf.mxu0
    %v187 = vadd.f32 %v101, %v186
    %v188 = vpop.f32.mrf.mxu0
    %v189 = vadd.f32 %v105, %v188
    %190 = vmatprep.mubr.f32.mxu0 0.0
    %191 = vmatmul.mubr.f32.gmra.mxu0 %v59
    %v192 = vpop.f32.mrf.mxu0
    %v193 = vadd.f32 %v101, %v192
    %v194 = vpop.f32.mrf.mxu0
    %v195 = vadd.f32 %v105, %v194
    %196 = vmatprep.mubr.f32.mxu0 0.0
    %197 = vmatmul.mubr.f32.gmra.mxu0 %v60
    %v198 = vpop.f32.mrf.mxu0
    %v199 = vadd.f32 %v101, %v198
    %v200 = vpop.f32.mrf.mxu0
    %v201 = vadd.f32 %v105, %v200
    %202 = vmatprep.mubr.f32.mxu0 0.0
    %203 = vmatmul.mubr.f32.gmra.mxu0 %v61
    %v204 = vpop.f32.mrf.mxu0
    %v205 = vadd.f32 %v101, %v204
    %v206 = vpop.f32.mrf.mxu0
    %v207 = vadd.f32 %v105, %v206
    %208 = vmatprep.mubr.f32.mxu0 0.0
    %209 = vmatmul.mubr.f32.gmra.mxu0 %v62
    %v210 = vpop.f32.mrf.mxu0
    %v211 = vadd.f32 %v101, %v210
    %v212 = vpop.f32.mrf.mxu0
    %v213 = vadd.f32 %v105, %v212
    %214 = vmatprep.mubr.f32.mxu0 0.0
    %215 = vmatmul.mubr.f32.gmra.mxu0 %v63
    %v216 = vpop.f32.mrf.mxu0
    %v217 = vadd.f32 %v101, %v216
    %v218 = vpop.f32.mrf.mxu0
    %v219 = vadd.f32 %v105, %v218
    %220 = vdwg.mxu0
    %v221 = vmax.f32 %v175, 0.0
    %v222 = vmax.f32 %v181, 0.0
    %v223 = vmax.f32 %v187, 0.0
    %v224 = vmax.f32 %v193, 0.0
    %v225 = vmax.f32 %v199, 0.0
    %v226 = vmax.f32 %v205, 0.0
    %v227 = vmax.f32 %v211, 0.0
    %v228 = vmax.f32 %v217, 0.0
    %v229 = vxor.u32 %v177, 2147483648
    %v230 = vxor.u32 %v183, 2147483648
    %v231 = vxor.u32 %v189, 2147483648
    %v232 = vxor.u32 %v195, 2147483648
    %v233 = vxor.u32 %v201, 2147483648
    %v234 = vxor.u32 %v207, 2147483648
    %v235 = vxor.u32 %v213, 2147483648
    %v236 = vxor.u32 %v219, 2147483648
    %v237 = vmul.f32 %v229, 1.442695
    %v238 = vpow.pop %v237
    %v239 = vmul.f32 %v230, 1.442695
    %v240 = vpow.pop %v239
    %v241 = vmul.f32 %v231, 1.442695
    %v242 = vpow.pop %v241
    %v243 = vmul.f32 %v232, 1.442695
    %v244 = vpow.pop %v243
    %v245 = vmul.f32 %v233, 1.442695
    %v246 = vpow.pop %v245
    %v247 = vmul.f32 %v234, 1.442695
    %v248 = vpow.pop %v247
    %v249 = vmul.f32 %v235, 1.442695
    %v250 = vpow.pop %v249
    %v251 = vmul.f32 %v236, 1.442695
    %v252 = vpow.pop %v251
    %v253 = vadd.f32 %v238, 1.0
    %v254 = vadd.f32 %v240, 1.0
    %v255 = vadd.f32 %v242, 1.0
    %v256 = vadd.f32 %v244, 1.0
    %v257 = vadd.f32 %v246, 1.0
    %v258 = vadd.f32 %v248, 1.0
    %v259 = vadd.f32 %v250, 1.0
    %v260 = vadd.f32 %v252, 1.0
    %v261 = vrcp.pop %v253
    %v262 = vmul.f32 1.0, %v261
    %v263 = vrcp.pop %v254
    %v264 = vmul.f32 1.0, %v263
    %v265 = vrcp.pop %v255
    %v266 = vmul.f32 1.0, %v265
    %v267 = vrcp.pop %v256
    %v268 = vmul.f32 1.0, %v267
    %v269 = vrcp.pop %v257
    %v270 = vmul.f32 1.0, %v269
    %v271 = vrcp.pop %v258
    %v272 = vmul.f32 1.0, %v271
    %v273 = vrcp.pop %v259
    %v274 = vmul.f32 1.0, %v273
    %v275 = vrcp.pop %v260
    %v276 = vmul.f32 1.0, %v275
    %v277 = vsub.f32 %v56, %v221
    %v278 = vsub.f32 %v57, %v222
    %v279 = vsub.f32 %v58, %v223
    %v280 = vsub.f32 %v59, %v224
    %v281 = vsub.f32 %v60, %v225
    %v282 = vsub.f32 %v61, %v226
    %v283 = vsub.f32 %v62, %v227
    %v284 = vsub.f32 %v63, %v228
    %v285 = vmul.f32 %v262, %v277
    %v286 = vmul.f32 %v264, %v278
    %v287 = vmul.f32 %v266, %v279
    %v288 = vmul.f32 %v268, %v280
    %v289 = vmul.f32 %v270, %v281
    %v290 = vmul.f32 %v272, %v282
    %v291 = vmul.f32 %v274, %v283
    %v292 = vmul.f32 %v276, %v284
    %v293 = vadd.f32 %v221, %v285
    %v294 = vadd.f32 %v222, %v286
    %v295 = vadd.f32 %v223, %v287
    %v296 = vadd.f32 %v224, %v288
    %v297 = vadd.f32 %v225, %v289
    %v298 = vadd.f32 %v226, %v290
    %v299 = vadd.f32 %v227, %v291
    %v300 = vadd.f32 %v228, %v292
    %s301 = scalar_lea.vmem [#allocation5], 256
    %v302 = vld [vmem:[%s301] sm:$0xff]
    %v303 = vld [vmem:[%s301 + $0x8] sm:$0xff]
    %v304 = vld [vmem:[%s301 + $0x10] sm:$0xff]
    %v305 = vld [vmem:[%s301 + $0x18] sm:$0xff]
    %v306 = vld [vmem:[%s301 + $0x20] sm:$0xff]
    %v307 = vld [vmem:[%s301 + $0x28] sm:$0xff]
    %v308 = vld [vmem:[%s301 + $0x30] sm:$0xff]
    %v309 = vld [vmem:[%s301 + $0x38] sm:$0xff]
    %v310 = vld [vmem:[%s301 + $0x40] sm:$0xff]
    %v311 = vld [vmem:[%s301 + $0x48] sm:$0xff]
    %v312 = vld [vmem:[%s301 + $0x50] sm:$0xff]
    %v313 = vld [vmem:[%s301 + $0x58] sm:$0xff]
    %v314 = vld [vmem:[%s301 + $0x60] sm:$0xff]
    %v315 = vld [vmem:[%s301 + $0x68] sm:$0xff]
    %v316 = vld [vmem:[%s301 + $0x70] sm:$0xff]
    %v317 = vld [vmem:[%s301 + $0x78] sm:$0xff]
    %v318 = vld [vmem:[%s301 + $0x80] sm:$0xff]
    %v319 = vld [vmem:[%s301 + $0x88] sm:$0xff]
    %v320 = vld [vmem:[%s301 + $0x90] sm:$0xff]
    %v321 = vld [vmem:[%s301 + $0x98] sm:$0xff]
    %v322 = vld [vmem:[%s301 + $0xa0] sm:$0xff]
    %v323 = vld [vmem:[%s301 + $0xa8] sm:$0xff]
    %v324 = vld [vmem:[%s301 + $0xb0] sm:$0xff]
    %v325 = vld [vmem:[%s301 + $0xb8] sm:$0xff]
    %v326 = vld [vmem:[%s301 + $0xc0] sm:$0xff]
    %v327 = vld [vmem:[%s301 + $0xc8] sm:$0xff]
    %v328 = vld [vmem:[%s301 + $0xd0] sm:$0xff]
    %v329 = vld [vmem:[%s301 + $0xd8] sm:$0xff]
    %v330 = vld [vmem:[%s301 + $0xe0] sm:$0xff]
    %v331 = vld [vmem:[%s301 + $0xe8] sm:$0xff]
    %v332 = vld [vmem:[%s301 + $0xf0] sm:$0xff]
    %v333 = vld [vmem:[%s301 + $0xf8] sm:$0xff]
    %s334 = scalar_lea.vmem [#allocation7], 2
    %v335 = vld [vmem:[%s334] sm:$0x3]
    %v337 = vlaneseq
    %v338 = vshrl.u32 %v337, 7
    %v339 = vsub.s32 0, %v338
    %v340 = vrot.slane %v335, %v339
    %v341 = vlaneseq
    %v342 = vshrl.u32 %v341, 7
    %v343 = vsub.s32 1, %v342
    %v344 = vrot.slane %v335, %v343
    %347 = vmatprep.subr.mxu0 %v333
    %348 = vmatpush1.msra.mxu0 %v332
    %349 = vmatprep.subr.mxu0 %v331
    %350 = vmatpush1.msra.mxu0 %v330
    %351 = vmatprep.subr.mxu0 %v329
    %352 = vmatpush1.msra.mxu0 %v328
    %353 = vmatprep.subr.mxu0 %v327
    %354 = vmatpush1.msra.mxu0 %v326
    %355 = vmatprep.subr.mxu0 %v325
    %356 = vmatpush1.msra.mxu0 %v324
    %357 = vmatprep.subr.mxu0 %v323
    %358 = vmatpush1.msra.mxu0 %v322
    %359 = vmatprep.subr.mxu0 %v321
    %360 = vmatpush1.msra.mxu0 %v320
    %361 = vmatprep.subr.mxu0 %v319
    %362 = vmatpush1.msra.mxu0 %v318
    %363 = vmatprep.subr.mxu0 %v317
    %364 = vmatpush1.msra.mxu0 %v316
    %365 = vmatprep.subr.mxu0 %v315
    %366 = vmatpush1.msra.mxu0 %v314
    %367 = vmatprep.subr.mxu0 %v313
    %368 = vmatpush1.msra.mxu0 %v312
    %369 = vmatprep.subr.mxu0 %v311
    %370 = vmatpush1.msra.mxu0 %v310
    %371 = vmatprep.subr.mxu0 %v309
    %372 = vmatpush1.msra.mxu0 %v308
    %373 = vmatprep.subr.mxu0 %v307
    %374 = vmatpush1.msra.mxu0 %v306
    %375 = vmatprep.subr.mxu0 %v305
    %376 = vmatpush1.msra.mxu0 %v304
    %377 = vmatprep.subr.mxu0 %v303
    %378 = vmatpush1.msra.mxu0 %v302
    %379 = vmatprep.subr.mxu0 0.0
    %380 = vmatpush2.msra.mxu0 0.0
    %381 = vmatprep.subr.mxu0 0.0
    %382 = vmatpush2.msra.mxu0 0.0
    %383 = vmatprep.subr.mxu0 0.0
    %384 = vmatpush2.msra.mxu0 0.0
    %385 = vmatprep.subr.mxu0 0.0
    %386 = vmatpush2.msra.mxu0 0.0
    %387 = vmatprep.subr.mxu0 0.0
    %388 = vmatpush2.msra.mxu0 0.0
    %389 = vmatprep.subr.mxu0 0.0
    %390 = vmatpush2.msra.mxu0 0.0
    %391 = vmatprep.subr.mxu0 0.0
    %392 = vmatpush2.msra.mxu0 0.0
    %393 = vmatprep.subr.mxu0 0.0
    %394 = vmatpush2.msra.mxu0 0.0
    %395 = vmatprep.subr.mxu0 0.0
    %396 = vmatpush2.msra.mxu0 0.0
    %397 = vmatprep.subr.mxu0 0.0
    %398 = vmatpush2.msra.mxu0 0.0
    %399 = vmatprep.subr.mxu0 0.0
    %400 = vmatpush2.msra.mxu0 0.0
    %401 = vmatprep.subr.mxu0 0.0
    %402 = vmatpush2.msra.mxu0 0.0
    %403 = vmatprep.subr.mxu0 0.0
    %404 = vmatpush2.msra.mxu0 0.0
    %405 = vmatprep.subr.mxu0 0.0
    %406 = vmatpush2.msra.mxu0 0.0
    %407 = vmatprep.subr.mxu0 0.0
    %408 = vmatpush2.msra.mxu0 0.0
    %409 = vmatprep.subr.mxu0 0.0
    %410 = vmatpush2.msra.mxu0 0.0
    %411 = vmatprep.mubr.f32.mxu0 0.0
    %412 = vmatmul.mubr.f32.gmra.mxu0 %v293
    %v413 = vpop.f32.mrf.mxu0
    %v414 = vadd.f32 %v340, %v413
    %v415 = vpop.f32.mrf.mxu0
    %v416 = vadd.f32 %v344, %v415
    %417 = vmatprep.mubr.f32.mxu0 0.0
    %418 = vmatmul.mubr.f32.gmra.mxu0 %v294
    %v419 = vpop.f32.mrf.mxu0
    %v420 = vadd.f32 %v340, %v419
    %v421 = vpop.f32.mrf.mxu0
    %v422 = vadd.f32 %v344, %v421
    %423 = vmatprep.mubr.f32.mxu0 0.0
    %424 = vmatmul.mubr.f32.gmra.mxu0 %v295
    %v425 = vpop.f32.mrf.mxu0
    %v426 = vadd.f32 %v340, %v425
    %v427 = vpop.f32.mrf.mxu0
    %v428 = vadd.f32 %v344, %v427
    %429 = vmatprep.mubr.f32.mxu0 0.0
    %430 = vmatmul.mubr.f32.gmra.mxu0 %v296
    %v431 = vpop.f32.mrf.mxu0
    %v432 = vadd.f32 %v340, %v431
    %v433 = vpop.f32.mrf.mxu0
    %v434 = vadd.f32 %v344, %v433
    %435 = vmatprep.mubr.f32.mxu0 0.0
    %436 = vmatmul.mubr.f32.gmra.mxu0 %v297
    %v437 = vpop.f32.mrf.mxu0
    %v438 = vadd.f32 %v340, %v437
    %v439 = vpop.f32.mrf.mxu0
    %v440 = vadd.f32 %v344, %v439
    %441 = vmatprep.mubr.f32.mxu0 0.0
    %442 = vmatmul.mubr.f32.gmra.mxu0 %v298
    %v443 = vpop.f32.mrf.mxu0
    %v444 = vadd.f32 %v340, %v443
    %v445 = vpop.f32.mrf.mxu0
    %v446 = vadd.f32 %v344, %v445
    %447 = vmatprep.mubr.f32.mxu0 0.0
    %448 = vmatmul.mubr.f32.gmra.mxu0 %v299
    %v449 = vpop.f32.mrf.mxu0
    %v450 = vadd.f32 %v340, %v449
    %v451 = vpop.f32.mrf.mxu0
    %v452 = vadd.f32 %v344, %v451
    %453 = vmatprep.mubr.f32.mxu0 0.0
    %454 = vmatmul.mubr.f32.gmra.mxu0 %v300
    %v455 = vpop.f32.mrf.mxu0
    %v456 = vadd.f32 %v340, %v455
    %v457 = vpop.f32.mrf.mxu0
    %v458 = vadd.f32 %v344, %v457
    %459 = vdwg.mxu0
    %v460 = vmax.f32 %v414, 0.0
    %v461 = vmax.f32 %v420, 0.0
    %v462 = vmax.f32 %v426, 0.0
    %v463 = vmax.f32 %v432, 0.0
    %v464 = vmax.f32 %v438, 0.0
    %v465 = vmax.f32 %v444, 0.0
    %v466 = vmax.f32 %v450, 0.0
    %v467 = vmax.f32 %v456, 0.0
    %v468 = vxor.u32 %v416, 2147483648
    %v469 = vxor.u32 %v422, 2147483648
    %v470 = vxor.u32 %v428, 2147483648
    %v471 = vxor.u32 %v434, 2147483648
    %v472 = vxor.u32 %v440, 2147483648
    %v473 = vxor.u32 %v446, 2147483648
    %v474 = vxor.u32 %v452, 2147483648
    %v475 = vxor.u32 %v458, 2147483648
    %v476 = vmul.f32 %v468, 1.442695
    %v477 = vpow.pop %v476
    %v478 = vmul.f32 %v469, 1.442695
    %v479 = vpow.pop %v478
    %v480 = vmul.f32 %v470, 1.442695
    %v481 = vpow.pop %v480
    %v482 = vmul.f32 %v471, 1.442695
    %v483 = vpow.pop %v482
    %v484 = vmul.f32 %v472, 1.442695
    %v485 = vpow.pop %v484
    %v486 = vmul.f32 %v473, 1.442695
    %v487 = vpow.pop %v486
    %v488 = vmul.f32 %v474, 1.442695
    %v489 = vpow.pop %v488
    %v490 = vmul.f32 %v475, 1.442695
    %v491 = vpow.pop %v490
    %v492 = vadd.f32 %v477, 1.0
    %v493 = vadd.f32 %v479, 1.0
    %v494 = vadd.f32 %v481, 1.0
    %v495 = vadd.f32 %v483, 1.0
    %v496 = vadd.f32 %v485, 1.0
    %v497 = vadd.f32 %v487, 1.0
    %v498 = vadd.f32 %v489, 1.0
    %v499 = vadd.f32 %v491, 1.0
    %v500 = vrcp.pop %v492
    %v501 = vmul.f32 1.0, %v500
    %v502 = vrcp.pop %v493
    %v503 = vmul.f32 1.0, %v502
    %v504 = vrcp.pop %v494
    %v505 = vmul.f32 1.0, %v504
    %v506 = vrcp.pop %v495
    %v507 = vmul.f32 1.0, %v506
    %v508 = vrcp.pop %v496
    %v509 = vmul.f32 1.0, %v508
    %v510 = vrcp.pop %v497
    %v511 = vmul.f32 1.0, %v510
    %v512 = vrcp.pop %v498
    %v513 = vmul.f32 1.0, %v512
    %v514 = vrcp.pop %v499
    %v515 = vmul.f32 1.0, %v514
    %v516 = vsub.f32 %v293, %v460
    %v517 = vsub.f32 %v294, %v461
    %v518 = vsub.f32 %v295, %v462
    %v519 = vsub.f32 %v296, %v463
    %v520 = vsub.f32 %v297, %v464
    %v521 = vsub.f32 %v298, %v465
    %v522 = vsub.f32 %v299, %v466
    %v523 = vsub.f32 %v300, %v467
    %v524 = vmul.f32 %v501, %v516
    %v525 = vmul.f32 %v503, %v517
    %v526 = vmul.f32 %v505, %v518
    %v527 = vmul.f32 %v507, %v519
    %v528 = vmul.f32 %v509, %v520
    %v529 = vmul.f32 %v511, %v521
    %v530 = vmul.f32 %v513, %v522
    %v531 = vmul.f32 %v515, %v523
    %v532 = vadd.f32 %v460, %v524
    %v533 = vadd.f32 %v461, %v525
    %v534 = vadd.f32 %v462, %v526
    %v535 = vadd.f32 %v463, %v527
    %v536 = vadd.f32 %v464, %v528
    %v537 = vadd.f32 %v465, %v529
    %v538 = vadd.f32 %v466, %v530
    %v539 = vadd.f32 %v467, %v531
    %540 = vst [vmem:[#allocation8] sm:$0xff] %v532
    %541 = vst [vmem:[#allocation8 + $0x8] sm:$0xff] %v533
    %542 = vst [vmem:[#allocation8 + $0x10] sm:$0xff] %v534
    %543 = vst [vmem:[#allocation8 + $0x18] sm:$0xff] %v535
    %544 = vst [vmem:[#allocation8 + $0x20] sm:$0xff] %v536
    %545 = vst [vmem:[#allocation8 + $0x28] sm:$0xff] %v537
    %546 = vst [vmem:[#allocation8 + $0x30] sm:$0xff] %v538
    %547 = vst [vmem:[#allocation8 + $0x38] sm:$0xff] %v539
    // Predicated region
    $region26: #{tpu_custom_call.1} parent=1 // pred_check
      _
    $region27: #{tpu_custom_call.1} parent=1 // pred_check_branch
      %549 = sbr.rel (0) target = $region29
    $region28: #{tpu_custom_call.1} parent=1 // pred_region
      %s551 = ssub.s32 1024, 1024
      %552 = vsyncadd [#allocation4], %s551
      %s553 = sshll.u32 [#allocation8], 4
      %s554 = int_to_ptr.vmem [resolvable:$true] %s553
      %559 = dma.vmem_to_hbm [thread:$0]  %s554, 1024, %s3, [#allocation4], 128, 128, 8
    $region29: #{tpu_custom_call.1} parent=1 // pred_fallthru
      _
    // Predicated region
    $region30: #{tpu_custom_call.1} parent=1 // pred_check
      _
    $region31: #{tpu_custom_call.1} parent=1 // pred_check_branch
      %561 = sbr.rel (0) target = $region33
    $region32: #{tpu_custom_call.1} parent=1 // pred_region
      %562 = dma.done [#allocation4], 1024
    $region33: #{tpu_custom_call.1} parent=1 // pred_fallthru
      _
    %563 = vsyncpa [#allocation3], 1
    %564 = vsyncpa [#allocation6], 1
    %565 = vsyncpa [#allocation4], 1

// kernel: tpu_custom_call.1
$region0: #{tpu_custom_call.1}
  #allocation0 [shape = 'u32[]', space=smem, size = 0x4, offset = 0x4, fixed_abs, tag = 'smem constant byte address 0x4 - core index']
  #allocation1 [shape = 'u32[144,128]{1,0:T(1,128)}', space=vmem, size = 0x12000, scoped, tag = 'internal scratch']
  %s0 = inlined_call_operand.hbm [shape: f32[64,128], index: 0, kind: input, shape index: {}]
  %s1 = inlined_call_operand.hbm [shape: f32[2,128,256], index: 1, kind: input, shape index: {}]
  %s2 = inlined_call_operand.hbm [shape: f32[2,1,256], index: 2, kind: input, shape index: {}]
  %s3 = inlined_call_operand.hbm [shape: f32[64,128], index: 3, kind: output, shape index: {}]
  %s4 = sld [smem:[#allocation0]]
  $region34: #{tpu_custom_call.1} parent=0
    _
  %s6 = ssub.s32 1, %s4
  %s7 = scalar_select 0, %s6, %s4
  $region1: #{tpu_custom_call.1} parent=0
    #allocation2 [shape = 'u8[32768]{0}', space=vmem, size = 0x8000, scoped, tag = 'input window, operand 0, single buffered']
    #allocation3 [shape = 's32[1]{0}', space=sflag, size = 0x4, scoped, tag = 'scoped memory for tpu_custom_call.1']
    #allocation4 [shape = 's32[1]{0}', space=sflag, size = 0x4, scoped, tag = 'scoped memory for tpu_custom_call.1']
    #allocation5 [shape = 'u8[262144]{0}', space=vmem, size = 0x40000, scoped, tag = 'input window, operand 1, single buffered']
    #allocation6 [shape = 's32[1]{0}', space=sflag, size = 0x4, scoped, tag = 'scoped memory for tpu_custom_call.1']
    #allocation7 [shape = 'u8[2048]{0}', space=vmem, size = 0x800, scoped, tag = 'input window, operand 2, single buffered']
    #allocation8 [shape = 'u8[32768]{0}', space=vmem, size = 0x8000, scoped, tag = 'output window, operand 0, single buffered']
    %8 = vsyncpa [#allocation3], 0
    %9 = vsyncpa [#allocation6], 0
    %10 = vsyncpa [#allocation4], 0
    // Predicated region
    $region2: #{tpu_custom_call.1} parent=1 // pred_check
      _
    $region3: #{tpu_custom_call.1} parent=1 // pred_check_branch
      %12 = sbr.rel (0) target = $region5
    $region4: #{tpu_custom_call.1} parent=1 // pred_region
      %s14 = ssub.s32 1024, 1024
      %15 = vsyncadd [#allocation3], %s14
      %s16 = sshll.u32 [#allocation2], 4
      %s17 = int_to_ptr.vmem [resolvable:$true] %s16
      %22 = dma.hbm_to_vmem [thread:$0]  %s0, 1024, %s17, [#allocation3], 128, 128, 8
    $region5: #{tpu_custom_call.1} parent=1 // pred_fallthru
      _
    // Predicated region
    $region6: #{tpu_custom_call.1} parent=1 // pred_check
      _
    $region7: #{tpu_custom_call.1} parent=1 // pred_check_branch
      %24 = sbr.rel (0) target = $region9
    $region8: #{tpu_custom_call.1} parent=1 // pred_region
      %s26 = ssub.s32 8192, 8192
      %27 = vsyncadd [#allocation6], %s26
      %s28 = sshll.u32 [#allocation5], 4
      %s29 = int_to_ptr.vmem [resolvable:$true] %s28
      %34 = dma.hbm_to_vmem [thread:$0]  %s1, 8192, %s29, [#allocation6], 256, 256, 16
    $region9: #{tpu_custom_call.1} parent=1 // pred_fallthru
      _
    // Predicated region
    $region10: #{tpu_custom_call.1} parent=1 // pred_check
      _
    $region11: #{tpu_custom_call.1} parent=1 // pred_check_branch
      %36 = sbr.rel (0) target = $region13
    $region12: #{tpu_custom_call.1} parent=1 // pred_region
      %s38 = ssub.s32 64, 64
      %39 = vsyncadd [#allocation6], %s38
      %s40 = sshll.u32 [#allocation7], 4
      %s41 = int_to_ptr.vmem [resolvable:$true] %s40
      %46 = dma.hbm_to_vmem [thread:$0]  %s2, 64, %s41, [#allocation6], 32, 32, 2
    $region13: #{tpu_custom_call.1} parent=1 // pred_fallthru
      _
    // Predicated region
    $region14: #{tpu_custom_call.1} parent=1 // pred_check
      _
    $region15: #{tpu_custom_call.1} parent=1 // pred_check_branch
      %48 = sbr.rel (0) target = $region17
    $region16: #{tpu_custom_call.1} parent=1 // pred_region
      %49 = dma.done [#allocation3], 1024
    $region17: #{tpu_custom_call.1} parent=1 // pred_fallthru
      _
    // Predicated region
    $region18: #{tpu_custom_call.1} parent=1 // pred_check
      _
    $region19: #{tpu_custom_call.1} parent=1 // pred_check_branch
      %51 = sbr.rel (0) target = $region21
    $region20: #{tpu_custom_call.1} parent=1 // pred_region
      %52 = dma.done [#allocation6], 8192
    $region21: #{tpu_custom_call.1} parent=1 // pred_fallthru
      _
    // Predicated region
    $region22: #{tpu_custom_call.1} parent=1 // pred_check
      _
    $region23: #{tpu_custom_call.1} parent=1 // pred_check_branch
      %54 = sbr.rel (0) target = $region25
    $region24: #{tpu_custom_call.1} parent=1 // pred_region
      %55 = dma.done [#allocation6], 64
    $region25: #{tpu_custom_call.1} parent=1 // pred_fallthru
      _
    %v56 = vld [vmem:[#allocation2] sm:$0xff]
    %v57 = vld [vmem:[#allocation2 + $0x8] sm:$0xff]
    %v58 = vld [vmem:[#allocation2 + $0x10] sm:$0xff]
    %v59 = vld [vmem:[#allocation2 + $0x18] sm:$0xff]
    %v60 = vld [vmem:[#allocation2 + $0x20] sm:$0xff]
    %v61 = vld [vmem:[#allocation2 + $0x28] sm:$0xff]
    %v62 = vld [vmem:[#allocation2 + $0x30] sm:$0xff]
    %v63 = vld [vmem:[#allocation2 + $0x38] sm:$0xff]
    %v64 = vld [vmem:[#allocation5] sm:$0xff]
    %v65 = vld [vmem:[#allocation5 + $0x8] sm:$0xff]
    %v66 = vld [vmem:[#allocation5 + $0x10] sm:$0xff]
    %v67 = vld [vmem:[#allocation5 + $0x18] sm:$0xff]
    %v68 = vld [vmem:[#allocation5 + $0x20] sm:$0xff]
    %v69 = vld [vmem:[#allocation5 + $0x28] sm:$0xff]
    %v70 = vld [vmem:[#allocation5 + $0x30] sm:$0xff]
    %v71 = vld [vmem:[#allocation5 + $0x38] sm:$0xff]
    %v72 = vld [vmem:[#allocation5 + $0x40] sm:$0xff]
    %v73 = vld [vmem:[#allocation5 + $0x48] sm:$0xff]
    %v74 = vld [vmem:[#allocation5 + $0x50] sm:$0xff]
    %v75 = vld [vmem:[#allocation5 + $0x58] sm:$0xff]
    %v76 = vld [vmem:[#allocation5 + $0x60] sm:$0xff]
    %v77 = vld [vmem:[#allocation5 + $0x68] sm:$0xff]
    %v78 = vld [vmem:[#allocation5 + $0x70] sm:$0xff]
    %v79 = vld [vmem:[#allocation5 + $0x78] sm:$0xff]
    %v80 = vld [vmem:[#allocation5 + $0x80] sm:$0xff]
    %v81 = vld [vmem:[#allocation5 + $0x88] sm:$0xff]
    %v82 = vld [vmem:[#allocation5 + $0x90] sm:$0xff]
    %v83 = vld [vmem:[#allocation5 + $0x98] sm:$0xff]
    %v84 = vld [vmem:[#allocation5 + $0xa0] sm:$0xff]
    %v85 = vld [vmem:[#allocation5 + $0xa8] sm:$0xff]
    %v86 = vld [vmem:[#allocation5 + $0xb0] sm:$0xff]
    %v87 = vld [vmem:[#allocation5 + $0xb8] sm:$0xff]
    %v88 = vld [vmem:[#allocation5 + $0xc0] sm:$0xff]
    %v89 = vld [vmem:[#allocation5 + $0xc8] sm:$0xff]
    %v90 = vld [vmem:[#allocation5 + $0xd0] sm:$0xff]
    %v91 = vld [vmem:[#allocation5 + $0xd8] sm:$0xff]
    %v92 = vld [vmem:[#allocation5 + $0xe0] sm:$0xff]
    %v93 = vld [vmem:[#allocation5 + $0xe8] sm:$0xff]
    %v94 = vld [vmem:[#allocation5 + $0xf0] sm:$0xff]
    %v95 = vld [vmem:[#allocation5 + $0xf8] sm:$0xff]
    %v96 = vld [vmem:[#allocation7] sm:$0x3]
    %v98 = vlaneseq
    %v99 = vshrl.u32 %v98, 7
    %v100 = vsub.s32 0, %v99
    %v101 = vrot.slane %v96, %v100
    %v102 = vlaneseq
    %v103 = vshrl.u32 %v102, 7
    %v104 = vsub.s32 1, %v103
    %v105 = vrot.slane %v96, %v104
    %108 = vmatprep.subr.mxu0 %v95
    %109 = vmatpush1.msra.mxu0 %v94
    %110 = vmatprep.subr.mxu0 %v93
    %111 = vmatpush1.msra.mxu0 %v92
    %112 = vmatprep.subr.mxu0 %v91
    %113 = vmatpush1.msra.mxu0 %v90
    %114 = vmatprep.subr.mxu0 %v89
    %115 = vmatpush1.msra.mxu0 %v88
    %116 = vmatprep.subr.mxu0 %v87
    %117 = vmatpush1.msra.mxu0 %v86
    %118 = vmatprep.subr.mxu0 %v85
    %119 = vmatpush1.msra.mxu0 %v84
    %120 = vmatprep.subr.mxu0 %v83
    %121 = vmatpush1.msra.mxu0 %v82
    %122 = vmatprep.subr.mxu0 %v81
    %123 = vmatpush1.msra.mxu0 %v80
    %124 = vmatprep.subr.mxu0 %v79
    %125 = vmatpush1.msra.mxu0 %v78
    %126 = vmatprep.subr.mxu0 %v77
    %127 = vmatpush1.msra.mxu0 %v76
    %128 = vmatprep.subr.mxu0 %v75
    %129 = vmatpush1.msra.mxu0 %v74
    %130 = vmatprep.subr.mxu0 %v73
    %131 = vmatpush1.msra.mxu0 %v72
    %132 = vmatprep.subr.mxu0 %v71
    %133 = vmatpush1.msra.mxu0 %v70
    %134 = vmatprep.subr.mxu0 %v69
    %135 = vmatpush1.msra.mxu0 %v68
    %136 = vmatprep.subr.mxu0 %v67
    %137 = vmatpush1.msra.mxu0 %v66
    %138 = vmatprep.subr.mxu0 %v65
    %139 = vmatpush1.msra.mxu0 %v64
    %140 = vmatprep.subr.mxu0 0.0
    %141 = vmatpush2.msra.mxu0 0.0
    %142 = vmatprep.subr.mxu0 0.0
    %143 = vmatpush2.msra.mxu0 0.0
    %144 = vmatprep.subr.mxu0 0.0
    %145 = vmatpush2.msra.mxu0 0.0
    %146 = vmatprep.subr.mxu0 0.0
    %147 = vmatpush2.msra.mxu0 0.0
    %148 = vmatprep.subr.mxu0 0.0
    %149 = vmatpush2.msra.mxu0 0.0
    %150 = vmatprep.subr.mxu0 0.0
    %151 = vmatpush2.msra.mxu0 0.0
    %152 = vmatprep.subr.mxu0 0.0
    %153 = vmatpush2.msra.mxu0 0.0
    %154 = vmatprep.subr.mxu0 0.0
    %155 = vmatpush2.msra.mxu0 0.0
    %156 = vmatprep.subr.mxu0 0.0
    %157 = vmatpush2.msra.mxu0 0.0
    %158 = vmatprep.subr.mxu0 0.0
    %159 = vmatpush2.msra.mxu0 0.0
    %160 = vmatprep.subr.mxu0 0.0
    %161 = vmatpush2.msra.mxu0 0.0
    %162 = vmatprep.subr.mxu0 0.0
    %163 = vmatpush2.msra.mxu0 0.0
    %164 = vmatprep.subr.mxu0 0.0
    %165 = vmatpush2.msra.mxu0 0.0
    %166 = vmatprep.subr.mxu0 0.0
    %167 = vmatpush2.msra.mxu0 0.0
    %168 = vmatprep.subr.mxu0 0.0
    %169 = vmatpush2.msra.mxu0 0.0
    %170 = vmatprep.subr.mxu0 0.0
    %171 = vmatpush2.msra.mxu0 0.0
    %172 = vmatprep.mubr.f32.mxu0 0.0
    %173 = vmatmul.mubr.f32.gmra.mxu0 %v56
    %v174 = vpop.f32.mrf.mxu0
    %v175 = vadd.f32 %v101, %v174
    %v176 = vpop.f32.mrf.mxu0
    %v177 = vadd.f32 %v105, %v176
    %178 = vmatprep.mubr.f32.mxu0 0.0
    %179 = vmatmul.mubr.f32.gmra.mxu0 %v57
    %v180 = vpop.f32.mrf.mxu0
    %v181 = vadd.f32 %v101, %v180
    %v182 = vpop.f32.mrf.mxu0
    %v183 = vadd.f32 %v105, %v182
    %184 = vmatprep.mubr.f32.mxu0 0.0
    %185 = vmatmul.mubr.f32.gmra.mxu0 %v58
    %v186 = vpop.f32.mrf.mxu0
    %v187 = vadd.f32 %v101, %v186
    %v188 = vpop.f32.mrf.mxu0
    %v189 = vadd.f32 %v105, %v188
    %190 = vmatprep.mubr.f32.mxu0 0.0
    %191 = vmatmul.mubr.f32.gmra.mxu0 %v59
    %v192 = vpop.f32.mrf.mxu0
    %v193 = vadd.f32 %v101, %v192
    %v194 = vpop.f32.mrf.mxu0
    %v195 = vadd.f32 %v105, %v194
    %196 = vmatprep.mubr.f32.mxu0 0.0
    %197 = vmatmul.mubr.f32.gmra.mxu0 %v60
    %v198 = vpop.f32.mrf.mxu0
    %v199 = vadd.f32 %v101, %v198
    %v200 = vpop.f32.mrf.mxu0
    %v201 = vadd.f32 %v105, %v200
    %202 = vmatprep.mubr.f32.mxu0 0.0
    %203 = vmatmul.mubr.f32.gmra.mxu0 %v61
    %v204 = vpop.f32.mrf.mxu0
    %v205 = vadd.f32 %v101, %v204
    %v206 = vpop.f32.mrf.mxu0
    %v207 = vadd.f32 %v105, %v206
    %208 = vmatprep.mubr.f32.mxu0 0.0
    %209 = vmatmul.mubr.f32.gmra.mxu0 %v62
    %v210 = vpop.f32.mrf.mxu0
    %v211 = vadd.f32 %v101, %v210
    %v212 = vpop.f32.mrf.mxu0
    %v213 = vadd.f32 %v105, %v212
    %214 = vmatprep.mubr.f32.mxu0 0.0
    %215 = vmatmul.mubr.f32.gmra.mxu0 %v63
    %v216 = vpop.f32.mrf.mxu0
    %v217 = vadd.f32 %v101, %v216
    %v218 = vpop.f32.mrf.mxu0
    %v219 = vadd.f32 %v105, %v218
    %220 = vdwg.mxu0
    %v221 = vmax.f32 %v175, 0.0
    %v222 = vmax.f32 %v181, 0.0
    %v223 = vmax.f32 %v187, 0.0
    %v224 = vmax.f32 %v193, 0.0
    %v225 = vmax.f32 %v199, 0.0
    %v226 = vmax.f32 %v205, 0.0
    %v227 = vmax.f32 %v211, 0.0
    %v228 = vmax.f32 %v217, 0.0
    %v229 = vxor.u32 %v177, 2147483648
    %v230 = vxor.u32 %v183, 2147483648
    %v231 = vxor.u32 %v189, 2147483648
    %v232 = vxor.u32 %v195, 2147483648
    %v233 = vxor.u32 %v201, 2147483648
    %v234 = vxor.u32 %v207, 2147483648
    %v235 = vxor.u32 %v213, 2147483648
    %v236 = vxor.u32 %v219, 2147483648
    %v237 = vmul.f32 %v229, 1.442695
    %v238 = vpow.pop %v237
    %v239 = vmul.f32 %v230, 1.442695
    %v240 = vpow.pop %v239
    %v241 = vmul.f32 %v231, 1.442695
    %v242 = vpow.pop %v241
    %v243 = vmul.f32 %v232, 1.442695
    %v244 = vpow.pop %v243
    %v245 = vmul.f32 %v233, 1.442695
    %v246 = vpow.pop %v245
    %v247 = vmul.f32 %v234, 1.442695
    %v248 = vpow.pop %v247
    %v249 = vmul.f32 %v235, 1.442695
    %v250 = vpow.pop %v249
    %v251 = vmul.f32 %v236, 1.442695
    %v252 = vpow.pop %v251
    %v253 = vadd.f32 %v238, 1.0
    %v254 = vadd.f32 %v240, 1.0
    %v255 = vadd.f32 %v242, 1.0
    %v256 = vadd.f32 %v244, 1.0
    %v257 = vadd.f32 %v246, 1.0
    %v258 = vadd.f32 %v248, 1.0
    %v259 = vadd.f32 %v250, 1.0
    %v260 = vadd.f32 %v252, 1.0
    %v261 = vrcp.pop %v253
    %v262 = vmul.f32 1.0, %v261
    %v263 = vrcp.pop %v254
    %v264 = vmul.f32 1.0, %v263
    %v265 = vrcp.pop %v255
    %v266 = vmul.f32 1.0, %v265
    %v267 = vrcp.pop %v256
    %v268 = vmul.f32 1.0, %v267
    %v269 = vrcp.pop %v257
    %v270 = vmul.f32 1.0, %v269
    %v271 = vrcp.pop %v258
    %v272 = vmul.f32 1.0, %v271
    %v273 = vrcp.pop %v259
    %v274 = vmul.f32 1.0, %v273
    %v275 = vrcp.pop %v260
    %v276 = vmul.f32 1.0, %v275
    %v277 = vsub.f32 %v56, %v221
    %v278 = vsub.f32 %v57, %v222
    %v279 = vsub.f32 %v58, %v223
    %v280 = vsub.f32 %v59, %v224
    %v281 = vsub.f32 %v60, %v225
    %v282 = vsub.f32 %v61, %v226
    %v283 = vsub.f32 %v62, %v227
    %v284 = vsub.f32 %v63, %v228
    %v285 = vmul.f32 %v262, %v277
    %v286 = vmul.f32 %v264, %v278
    %v287 = vmul.f32 %v266, %v279
    %v288 = vmul.f32 %v268, %v280
    %v289 = vmul.f32 %v270, %v281
    %v290 = vmul.f32 %v272, %v282
    %v291 = vmul.f32 %v274, %v283
    %v292 = vmul.f32 %v276, %v284
    %v293 = vadd.f32 %v221, %v285
    %v294 = vadd.f32 %v222, %v286
    %v295 = vadd.f32 %v223, %v287
    %v296 = vadd.f32 %v224, %v288
    %v297 = vadd.f32 %v225, %v289
    %v298 = vadd.f32 %v226, %v290
    %v299 = vadd.f32 %v227, %v291
    %v300 = vadd.f32 %v228, %v292
    %s301 = scalar_lea.vmem [#allocation5], 256
    %v302 = vld [vmem:[%s301] sm:$0xff]
    %v303 = vld [vmem:[%s301 + $0x8] sm:$0xff]
    %v304 = vld [vmem:[%s301 + $0x10] sm:$0xff]
    %v305 = vld [vmem:[%s301 + $0x18] sm:$0xff]
    %v306 = vld [vmem:[%s301 + $0x20] sm:$0xff]
    %v307 = vld [vmem:[%s301 + $0x28] sm:$0xff]
    %v308 = vld [vmem:[%s301 + $0x30] sm:$0xff]
    %v309 = vld [vmem:[%s301 + $0x38] sm:$0xff]
    %v310 = vld [vmem:[%s301 + $0x40] sm:$0xff]
    %v311 = vld [vmem:[%s301 + $0x48] sm:$0xff]
    %v312 = vld [vmem:[%s301 + $0x50] sm:$0xff]
    %v313 = vld [vmem:[%s301 + $0x58] sm:$0xff]
    %v314 = vld [vmem:[%s301 + $0x60] sm:$0xff]
    %v315 = vld [vmem:[%s301 + $0x68] sm:$0xff]
    %v316 = vld [vmem:[%s301 + $0x70] sm:$0xff]
    %v317 = vld [vmem:[%s301 + $0x78] sm:$0xff]
    %v318 = vld [vmem:[%s301 + $0x80] sm:$0xff]
    %v319 = vld [vmem:[%s301 + $0x88] sm:$0xff]
    %v320 = vld [vmem:[%s301 + $0x90] sm:$0xff]
    %v321 = vld [vmem:[%s301 + $0x98] sm:$0xff]
    %v322 = vld [vmem:[%s301 + $0xa0] sm:$0xff]
    %v323 = vld [vmem:[%s301 + $0xa8] sm:$0xff]
    %v324 = vld [vmem:[%s301 + $0xb0] sm:$0xff]
    %v325 = vld [vmem:[%s301 + $0xb8] sm:$0xff]
    %v326 = vld [vmem:[%s301 + $0xc0] sm:$0xff]
    %v327 = vld [vmem:[%s301 + $0xc8] sm:$0xff]
    %v328 = vld [vmem:[%s301 + $0xd0] sm:$0xff]
    %v329 = vld [vmem:[%s301 + $0xd8] sm:$0xff]
    %v330 = vld [vmem:[%s301 + $0xe0] sm:$0xff]
    %v331 = vld [vmem:[%s301 + $0xe8] sm:$0xff]
    %v332 = vld [vmem:[%s301 + $0xf0] sm:$0xff]
    %v333 = vld [vmem:[%s301 + $0xf8] sm:$0xff]
    %s334 = scalar_lea.vmem [#allocation7], 2
    %v335 = vld [vmem:[%s334] sm:$0x3]
    %v337 = vlaneseq
    %v338 = vshrl.u32 %v337, 7
    %v339 = vsub.s32 0, %v338
    %v340 = vrot.slane %v335, %v339
    %v341 = vlaneseq
    %v342 = vshrl.u32 %v341, 7
    %v343 = vsub.s32 1, %v342
    %v344 = vrot.slane %v335, %v343
    %347 = vmatprep.subr.mxu0 %v333
    %348 = vmatpush1.msra.mxu0 %v332
    %349 = vmatprep.subr.mxu0 %v331
    %350 = vmatpush1.msra.mxu0 %v330
    %351 = vmatprep.subr.mxu0 %v329
    %352 = vmatpush1.msra.mxu0 %v328
    %353 = vmatprep.subr.mxu0 %v327
    %354 = vmatpush1.msra.mxu0 %v326
    %355 = vmatprep.subr.mxu0 %v325
    %356 = vmatpush1.msra.mxu0 %v324
    %357 = vmatprep.subr.mxu0 %v323
    %358 = vmatpush1.msra.mxu0 %v322
    %359 = vmatprep.subr.mxu0 %v321
    %360 = vmatpush1.msra.mxu0 %v320
    %361 = vmatprep.subr.mxu0 %v319
    %362 = vmatpush1.msra.mxu0 %v318
    %363 = vmatprep.subr.mxu0 %v317
    %364 = vmatpush1.msra.mxu0 %v316
    %365 = vmatprep.subr.mxu0 %v315
    %366 = vmatpush1.msra.mxu0 %v314
    %367 = vmatprep.subr.mxu0 %v313
    %368 = vmatpush1.msra.mxu0 %v312
    %369 = vmatprep.subr.mxu0 %v311
    %370 = vmatpush1.msra.mxu0 %v310
    %371 = vmatprep.subr.mxu0 %v309
    %372 = vmatpush1.msra.mxu0 %v308
    %373 = vmatprep.subr.mxu0 %v307
    %374 = vmatpush1.msra.mxu0 %v306
    %375 = vmatprep.subr.mxu0 %v305
    %376 = vmatpush1.msra.mxu0 %v304
    %377 = vmatprep.subr.mxu0 %v303
    %378 = vmatpush1.msra.mxu0 %v302
    %379 = vmatprep.subr.mxu0 0.0
    %380 = vmatpush2.msra.mxu0 0.0
    %381 = vmatprep.subr.mxu0 0.0
    %382 = vmatpush2.msra.mxu0 0.0
    %383 = vmatprep.subr.mxu0 0.0
    %384 = vmatpush2.msra.mxu0 0.0
    %385 = vmatprep.subr.mxu0 0.0
    %386 = vmatpush2.msra.mxu0 0.0
    %387 = vmatprep.subr.mxu0 0.0
    %388 = vmatpush2.msra.mxu0 0.0
    %389 = vmatprep.subr.mxu0 0.0
    %390 = vmatpush2.msra.mxu0 0.0
    %391 = vmatprep.subr.mxu0 0.0
    %392 = vmatpush2.msra.mxu0 0.0
    %393 = vmatprep.subr.mxu0 0.0
    %394 = vmatpush2.msra.mxu0 0.0
    %395 = vmatprep.subr.mxu0 0.0
    %396 = vmatpush2.msra.mxu0 0.0
    %397 = vmatprep.subr.mxu0 0.0
    %398 = vmatpush2.msra.mxu0 0.0
    %399 = vmatprep.subr.mxu0 0.0
    %400 = vmatpush2.msra.mxu0 0.0
    %401 = vmatprep.subr.mxu0 0.0
    %402 = vmatpush2.msra.mxu0 0.0
    %403 = vmatprep.subr.mxu0 0.0
    %404 = vmatpush2.msra.mxu0 0.0
    %405 = vmatprep.subr.mxu0 0.0
    %406 = vmatpush2.msra.mxu0 0.0
    %407 = vmatprep.subr.mxu0 0.0
    %408 = vmatpush2.msra.mxu0 0.0
    %409 = vmatprep.subr.mxu0 0.0
    %410 = vmatpush2.msra.mxu0 0.0
    %411 = vmatprep.mubr.f32.mxu0 0.0
    %412 = vmatmul.mubr.f32.gmra.mxu0 %v293
    %v413 = vpop.f32.mrf.mxu0
    %v414 = vadd.f32 %v340, %v413
    %v415 = vpop.f32.mrf.mxu0
    %v416 = vadd.f32 %v344, %v415
    %417 = vmatprep.mubr.f32.mxu0 0.0
    %418 = vmatmul.mubr.f32.gmra.mxu0 %v294
    %v419 = vpop.f32.mrf.mxu0
    %v420 = vadd.f32 %v340, %v419
    %v421 = vpop.f32.mrf.mxu0
    %v422 = vadd.f32 %v344, %v421
    %423 = vmatprep.mubr.f32.mxu0 0.0
    %424 = vmatmul.mubr.f32.gmra.mxu0 %v295
    %v425 = vpop.f32.mrf.mxu0
    %v426 = vadd.f32 %v340, %v425
    %v427 = vpop.f32.mrf.mxu0
    %v428 = vadd.f32 %v344, %v427
    %429 = vmatprep.mubr.f32.mxu0 0.0
    %430 = vmatmul.mubr.f32.gmra.mxu0 %v296
    %v431 = vpop.f32.mrf.mxu0
    %v432 = vadd.f32 %v340, %v431
    %v433 = vpop.f32.mrf.mxu0
    %v434 = vadd.f32 %v344, %v433
    %435 = vmatprep.mubr.f32.mxu0 0.0
    %436 = vmatmul.mubr.f32.gmra.mxu0 %v297
    %v437 = vpop.f32.mrf.mxu0
    %v438 = vadd.f32 %v340, %v437
    %v439 = vpop.f32.mrf.mxu0
    %v440 = vadd.f32 %v344, %v439
    %441 = vmatprep.mubr.f32.mxu0 0.0
    %442 = vmatmul.mubr.f32.gmra.mxu0 %v298
    %v443 = vpop.f32.mrf.mxu0
    %v444 = vadd.f32 %v340, %v443
    %v445 = vpop.f32.mrf.mxu0
    %v446 = vadd.f32 %v344, %v445
    %447 = vmatprep.mubr.f32.mxu0 0.0
    %448 = vmatmul.mubr.f32.gmra.mxu0 %v299
    %v449 = vpop.f32.mrf.mxu0
    %v450 = vadd.f32 %v340, %v449
    %v451 = vpop.f32.mrf.mxu0
    %v452 = vadd.f32 %v344, %v451
    %453 = vmatprep.mubr.f32.mxu0 0.0
    %454 = vmatmul.mubr.f32.gmra.mxu0 %v300
    %v455 = vpop.f32.mrf.mxu0
    %v456 = vadd.f32 %v340, %v455
    %v457 = vpop.f32.mrf.mxu0
    %v458 = vadd.f32 %v344, %v457
    %459 = vdwg.mxu0
    %v460 = vmax.f32 %v414, 0.0
    %v461 = vmax.f32 %v420, 0.0
    %v462 = vmax.f32 %v426, 0.0
    %v463 = vmax.f32 %v432, 0.0
    %v464 = vmax.f32 %v438, 0.0
    %v465 = vmax.f32 %v444, 0.0
    %v466 = vmax.f32 %v450, 0.0
    %v467 = vmax.f32 %v456, 0.0
    %v468 = vxor.u32 %v416, 2147483648
    %v469 = vxor.u32 %v422, 2147483648
    %v470 = vxor.u32 %v428, 2147483648
    %v471 = vxor.u32 %v434, 2147483648
    %v472 = vxor.u32 %v440, 2147483648
    %v473 = vxor.u32 %v446, 2147483648
    %v474 = vxor.u32 %v452, 2147483648
    %v475 = vxor.u32 %v458, 2147483648
    %v476 = vmul.f32 %v468, 1.442695
    %v477 = vpow.pop %v476
    %v478 = vmul.f32 %v469, 1.442695
    %v479 = vpow.pop %v478
    %v480 = vmul.f32 %v470, 1.442695
    %v481 = vpow.pop %v480
    %v482 = vmul.f32 %v471, 1.442695
    %v483 = vpow.pop %v482
    %v484 = vmul.f32 %v472, 1.442695
    %v485 = vpow.pop %v484
    %v486 = vmul.f32 %v473, 1.442695
    %v487 = vpow.pop %v486
    %v488 = vmul.f32 %v474, 1.442695
    %v489 = vpow.pop %v488
    %v490 = vmul.f32 %v475, 1.442695
    %v491 = vpow.pop %v490
    %v492 = vadd.f32 %v477, 1.0
    %v493 = vadd.f32 %v479, 1.0
    %v494 = vadd.f32 %v481, 1.0
    %v495 = vadd.f32 %v483, 1.0
    %v496 = vadd.f32 %v485, 1.0
    %v497 = vadd.f32 %v487, 1.0
    %v498 = vadd.f32 %v489, 1.0
    %v499 = vadd.f32 %v491, 1.0
    %v500 = vrcp.pop %v492
    %v501 = vmul.f32 1.0, %v500
    %v502 = vrcp.pop %v493
    %v503 = vmul.f32 1.0, %v502
    %v504 = vrcp.pop %v494
    %v505 = vmul.f32 1.0, %v504
    %v506 = vrcp.pop %v495
    %v507 = vmul.f32 1.0, %v506
    %v508 = vrcp.pop %v496
    %v509 = vmul.f32 1.0, %v508
    %v510 = vrcp.pop %v497
    %v511 = vmul.f32 1.0, %v510
    %v512 = vrcp.pop %v498
    %v513 = vmul.f32 1.0, %v512
    %v514 = vrcp.pop %v499
    %v515 = vmul.f32 1.0, %v514
    %v516 = vsub.f32 %v293, %v460
    %v517 = vsub.f32 %v294, %v461
    %v518 = vsub.f32 %v295, %v462
    %v519 = vsub.f32 %v296, %v463
    %v520 = vsub.f32 %v297, %v464
    %v521 = vsub.f32 %v298, %v465
    %v522 = vsub.f32 %v299, %v466
    %v523 = vsub.f32 %v300, %v467
    %v524 = vmul.f32 %v501, %v516
    %v525 = vmul.f32 %v503, %v517
    %v526 = vmul.f32 %v505, %v518
    %v527 = vmul.f32 %v507, %v519
    %v528 = vmul.f32 %v509, %v520
    %v529 = vmul.f32 %v511, %v521
    %v530 = vmul.f32 %v513, %v522
    %v531 = vmul.f32 %v515, %v523
    %v532 = vadd.f32 %v460, %v524
    %v533 = vadd.f32 %v461, %v525
    %v534 = vadd.f32 %v462, %v526
    %v535 = vadd.f32 %v463, %v527
    %v536 = vadd.f32 %v464, %v528
    %v537 = vadd.f32 %v465, %v529
    %v538 = vadd.f32 %v466, %v530
    %v539 = vadd.f32 %v467, %v531
    %540 = vst [vmem:[#allocation8] sm:$0xff] %v532
    %541 = vst [vmem:[#allocation8 + $0x8] sm:$0xff] %v533
    %542 = vst [vmem:[#allocation8 + $0x10] sm:$0xff] %v534
    %543 = vst [vmem:[#allocation8 + $0x18] sm:$0xff] %v535
    %544 = vst [vmem:[#allocation8 + $0x20] sm:$0xff] %v536
    %545 = vst [vmem:[#allocation8 + $0x28] sm:$0xff] %v537
    %546 = vst [vmem:[#allocation8 + $0x30] sm:$0xff] %v538
    %547 = vst [vmem:[#allocation8 + $0x38] sm:$0xff] %v539
    // Predicated region
    $region26: #{tpu_custom_call.1} parent=1 // pred_check
      _
    $region27: #{tpu_custom_call.1} parent=1 // pred_check_branch
      %549 = sbr.rel (0) target = $region29
    $region28: #{tpu_custom_call.1} parent=1 // pred_region
      %s551 = ssub.s32 1024, 1024
      %552 = vsyncadd [#allocation4], %s551
      %s553 = sshll.u32 [#allocation8], 4
      %s554 = int_to_ptr.vmem [resolvable:$true] %s553
      %559 = dma.vmem_to_hbm [thread:$0]  %s554, 1024, %s3, [#allocation4], 128, 128, 8
    $region29: #{tpu_custom_call.1} parent=1 // pred_fallthru
      _
    // Predicated region
    $region30: #{tpu_custom_call.1} parent=1 // pred_check
      _
    $region31: #{tpu_custom_call.1} parent=1 // pred_check_branch
      %561 = sbr.rel (0) target = $region33
    $region32: #{tpu_custom_call.1} parent=1 // pred_region
      %562 = dma.done [#allocation4], 1024
    $region33: #{tpu_custom_call.1} parent=1 // pred_fallthru
      _
    %563 = vsyncpa [#allocation3], 1
    %564 = vsyncpa [#allocation6], 1
    %565 = vsyncpa [#allocation4], 1

</llo_original>
